<compile_context>
chip_gen: v5e
topology: v5e:2x2
jax: 0.10.0
libtpu: 0.0.40
codegen_flags: <defaults>
</compile_context>

<pallas_src>
import jax
import jax.numpy as jnp
from jax.experimental import pallas as pl
from jax.experimental.pallas import tpu as pltpu


def _round_up(a, b):
    return (a + b - 1) // b * b


def _cdiv(a, b):
    return (a + b - 1) // b


def band_attention_kernel(x_ref, w_ref, o_ref):
    # x_ref: (TB, band, TS)          input tile, spatial on lanes
    # w_ref: (3*band_out, band)      stacked [Wq; Wk; Wv], resident in VMEM
    # o_ref: (TB, band_out, TS)      lane-dense output tile
    tb, band_out, _ = o_ref.shape
    w = w_ref[...]
    for b_i in range(tb):            # TB is small & static -> cheap unroll
        x = x_ref[b_i]                                              # (band, TS)
        # One MXU push for all three projections; accumulate in f32.
        qkv = jnp.dot(w, x, preferred_element_type=jnp.float32)     # (3*band_out, TS)
        q = qkv[0:band_out]
        k = qkv[band_out:2 * band_out]
        v = qkv[2 * band_out:3 * band_out]
        o_ref[b_i] = (v * jax.nn.sigmoid(q * k)).astype(o_ref.dtype)


def band_attention(x_nchw, wq, wk, wv, *, ts=16384, vmem_limit_bytes=None):
    """x_nchw: (N, band, W, H). wq/wk/wv: (band//2, band) (PyTorch Linear layout)."""
    n, band, w, h = x_nchw.shape
    band_out = wq.shape[0]
    s = w * h

    # Free view of NCHW: (N, band, S).
    x = x_nchw.reshape(n, band, s)

    # Pad only up to the next multiple of 128 (never to a multiple of ts);
    # in the common case (S % 128 == 0) there is no extra HBM pass at all.
    s_eff = _round_up(s, 128)
    if s_eff != s:
        x = jnp.pad(x, ((0, 0), (0, 0), (0, s_eff - s)))

    # Spatial tile: multiple of 128, capped by the requested ts and by S.
    ts_req = max(128, _round_up(ts, 128))
    s_tile = min(ts_req, s_eff)
    num_s_tiles = _cdiv(s_eff, s_tile)   # ragged last block is fine (lane-wise math)

    # Small-S case: pack several batch images per grid step to amortize the
    # per-step overhead, but keep >=2 grid steps so both v7x TCs are fed.
    tb = 1
    if num_s_tiles == 1 and n > 1:
        tb = min(n, max(1, ts_req // s_tile))
        if tb >= n:
            tb = max(1, (n + 1) // 2)
        while n % tb != 0:               # exact batch blocks (no ragged leading dim)
            tb -= 1

    # Fused projection weight (3*band_out, band); constant-folds under jit.
    w_stacked = jnp.concatenate([wq, wk, wv], axis=0).astype(x.dtype)

    grid = (n // tb, num_s_tiles)

    out = pl.pallas_call(
        band_attention_kernel,
        out_shape=jax.ShapeDtypeStruct((n, band_out, s_eff), x_nchw.dtype),
        grid_spec=pltpu.PrefetchScalarGridSpec(
            num_scalar_prefetch=0,
            grid=grid,
            in_specs=[
                pl.BlockSpec((tb, band, s_tile), lambda b, i: (b, 0, i)),
                pl.BlockSpec((3 * band_out, band), lambda b, i: (0, 0)),
            ],
            out_specs=pl.BlockSpec((tb, band_out, s_tile), lambda b, i: (b, 0, i)),
        ),
        compiler_params=pltpu.CompilerParams(
            dimension_semantics=("parallel", "parallel"),
            vmem_limit_bytes=vmem_limit_bytes,
        ),
    )(x, w_stacked)

    if s_eff != s:
        out = out[:, :, :s]
    # (N, band_out, S) -> (N, band_out, W, H): free reshape, already NCHW order.
    return out.reshape(n, band_out, w, h)


def band_attention_reference(x_nchw, wq, wk, wv):
    """Pure-JAX reference mirroring the PyTorch forward."""
    x = jnp.transpose(x_nchw, (0, 2, 3, 1))
    q = x @ wq.T
    k = x @ wk.T
    v = x @ wv.T
    att = jax.nn.sigmoid(q * k)
    out = v * att
    return jnp.transpose(out, (0, 3, 1, 2))


def _check(n, band, w, h, seed):
    key = jax.random.PRNGKey(seed)
    kx, kq, kk, kv = jax.random.split(key, 4)
    x = jax.random.normal(kx, (n, band, w, h), dtype=jnp.float32)
    scale = 1.0 / jnp.sqrt(jnp.float32(band))
    wq = jax.random.uniform(kq, (band // 2, band), jnp.float32, -scale, scale)
    wk = jax.random.uniform(kk, (band // 2, band), jnp.float32, -scale, scale)
    wv = jax.random.uniform(kv, (band // 2, band), jnp.float32, -scale, scale)

    out = jax.block_until_ready(band_attention(x, wq, wk, wv))
    ref = band_attention_reference(x, wq, wk, wv)
    assert out.shape == (n, band // 2, w, h), out.shape
    assert jnp.allclose(out, ref, atol=1e-5, rtol=1e-5), "mismatch vs reference"


if __name__ == "__main__":
    # Small deterministic setup: batch=2, band=32, spatial=16x16 (S % 128 == 0).
    _check(2, 32, 16, 16, seed=0)
    # Non-128-divisible spatial size exercises the pad-to-128 + final-slice path.
    _check(1, 32, 36, 36, seed=0)
    print("KERNEL_OK")
</pallas_src>

<mosaic_0001>
module attributes {stable_mosaic.version = 11 : i64} {
  func.func @band_attention_kernel(%arg0: i32, %arg1: i32, %arg2: memref<1x32x256xf32, #tpu.memory_space<vmem>>, %arg3: memref<48x32xf32, #tpu.memory_space<vmem>>, %arg4: memref<1x16x256xf32, #tpu.memory_space<vmem>>) attributes {dimension_semantics = [#tpu.dimension_semantics<parallel>, #tpu.dimension_semantics<parallel>], iteration_bounds = array<i64: 2, 1>, scalar_prefetch = 0 : i64, scratch_operands = 0 : i64, tpu.core_type = #tpu.core_type<tc>, window_params = [{transform_indices = @transform_0, window_bounds = array<i64: 1, 32, 256>}, {pipeline_mode = #tpu.pipeline_mode<synchronous>, transform_indices = @transform_1, window_bounds = array<i64: 48, 32>}, {transform_indices = @transform_2, window_bounds = array<i64: 1, 16, 256>}]} {
    %c0 = arith.constant 0 : index
    %c0_0 = arith.constant 0 : index
    %0 = vector.load %arg3[%c0, %c0_0] : memref<48x32xf32, #tpu.memory_space<vmem>>, vector<48x32xf32>
    %c0_1 = arith.constant 0 : index
    %c0_2 = arith.constant 0 : index
    %c0_3 = arith.constant 0 : index
    %1 = vector.load %arg2[%c0_1, %c0_2, %c0_3] : memref<1x32x256xf32, #tpu.memory_space<vmem>>, vector<1x32x256xf32>
    %2 = vector.shape_cast %1 : vector<1x32x256xf32> to vector<32x256xf32>
    %cst = arith.constant dense<0.000000e+00> : vector<48x256xf32>
    %3 = tpu.matmul %0, %2, %cst {dimension_numbers = #tpu.dot_dimension_numbers<[1], [0], [0], [1], [0, 0, 1, 1], [], []>} : vector<48x32xf32>, vector<32x256xf32>, vector<48x256xf32> -> vector<48x256xf32>
    %4 = vector.extract_strided_slice %3 {offsets = [0, 0], sizes = [16, 256], strides = [1, 1]} : vector<48x256xf32> to vector<16x256xf32>
    %5 = vector.extract_strided_slice %3 {offsets = [16, 0], sizes = [16, 256], strides = [1, 1]} : vector<48x256xf32> to vector<16x256xf32>
    %6 = vector.extract_strided_slice %3 {offsets = [32, 0], sizes = [16, 256], strides = [1, 1]} : vector<48x256xf32> to vector<16x256xf32>
    %7 = arith.mulf %4, %5 : vector<16x256xf32>
    %8 = arith.negf %7 : vector<16x256xf32>
    %9 = math.exp %8 : vector<16x256xf32>
    %cst_4 = arith.constant 1.000000e+00 : f32
    %10 = vector.broadcast %cst_4 : f32 to vector<16x256xf32>
    %11 = arith.addf %10, %9 : vector<16x256xf32>
    %12 = arith.divf %10, %11 : vector<16x256xf32>
    %13 = arith.mulf %6, %12 : vector<16x256xf32>
    %c0_5 = arith.constant 0 : index
    %c0_6 = arith.constant 0 : index
    %c0_7 = arith.constant 0 : index
    %14 = vector.load %arg4[%c0_5, %c0_6, %c0_7] : memref<1x16x256xf32, #tpu.memory_space<vmem>>, vector<1x16x256xf32>
    %15 = vector.shape_cast %14 : vector<1x16x256xf32> to vector<16x256xf32>
    %16 = vector.shape_cast %13 : vector<16x256xf32> to vector<1x16x256xf32>
    tpu.vector_store %arg4[%c0_5, %c0_6, %c0_7], %16 {strides = array<i32>} : memref<1x16x256xf32, #tpu.memory_space<vmem>>, vector<1x16x256xf32>,
    return
  }
  func.func @transform_0(%arg0: i32, %arg1: i32) -> (i32, i32, i32) {
    %c0_i32 = arith.constant 0 : i32
    %c0_i32_0 = arith.constant 0 : i32
    return %arg0, %c0_i32, %arg1 : i32, i32, i32
  }
  func.func @transform_1(%arg0: i32, %arg1: i32) -> (i32, i32) {
    %c0_i32 = arith.constant 0 : i32
    %c0_i32_0 = arith.constant 0 : i32
    %c0_i32_1 = arith.constant 0 : i32
    return %c0_i32, %c0_i32_0 : i32, i32
  }
  func.func @transform_2(%arg0: i32, %arg1: i32) -> (i32, i32, i32) {
    %c0_i32 = arith.constant 0 : i32
    %c0_i32_0 = arith.constant 0 : i32
    return %arg0, %c0_i32, %arg1 : i32, i32, i32
  }
}

</mosaic_0001>

<llo_original>
// kernel: tpu_custom_call.1
$region0: #{tpu_custom_call.1}
  #allocation0 [shape = 'u32[]', space=smem, size = 0x4, offset = 0x4, fixed_abs, tag = 'smem constant byte address 0x4 - core index']
  #allocation1 [shape = 'u32[72,128]{1,0:T(1,128)}', space=vmem, size = 0x9000, scoped, tag = 'internal scratch']
  %s0 = inlined_call_operand.hbm [shape: f32[2,32,256], index: 0, kind: input, shape index: {}]
  %s1 = inlined_call_operand.vmem [shape: f32[48,32], index: 1, kind: input, shape index: {}]
  %s2 = inlined_call_operand.hbm [shape: f32[2,16,256], index: 2, kind: output, shape index: {}]
  %s3 = sld [smem:[#allocation0]]
  $region45: #{tpu_custom_call.1} parent=0
    _
  %s5 = ssub.s32 1, %s3
  %s6 = scalar_select 0, %s5, %s3
  $region1: #{tpu_custom_call.1} parent=0
    #allocation2 [shape = 'u8[65536]{0}', space=vmem, size = 0x10000, scoped, tag = 'input window, operand 0']
    #allocation3 [shape = 's32[2]{0}', space=sflag, size = 0x8, scoped, tag = 'scoped memory for tpu_custom_call.1']
    #allocation4 [shape = 's32[2]{0}', space=sflag, size = 0x8, scoped, tag = 'scoped memory for tpu_custom_call.1']
    #allocation5 [shape = 'u8[32768]{0}', space=vmem, size = 0x8000, scoped, tag = 'output window, operand 0']
    %7 = vsyncpa [#allocation3], 0
    %s8 = scalar_lea.sflag [#allocation3], 1
    %9 = vsyncpa %s8, 0
    %10 = vsyncpa [#allocation4], 0
    %s11 = scalar_lea.sflag [#allocation4], 1
    %12 = vsyncpa %s11, 0
    loop: start=0, step=1, limit=4
    $region2: #{tpu_custom_call.1} parent=1 // loop_pre_header
      _
    $region3: #{tpu_custom_call.1} parent=1 // loop_header
      %s14 = sphi 0, %s18
      %p15 = scmp.ge.s32.totalorder %s14, 4
      %s21 = sphi 0, %s33
      %s22 = sphi 0, %s29
      %s23 = sphi 0, %s21
      %s24 = sphi 0, %s22
      %s25 = sphi 0, %s23
      %s26 = sphi 0, %s24
      %s38 = sphi 0, %s40
      %s41 = sphi 0, %s38
      %s42 = sphi 0, %s41
      %s58 = sphi 0, %s42
      %s62 = sphi 0, %s62
      %s64 = sphi 0, %s62
      %s65 = sphi 0, %s64
      %s79 = sphi 0, %s65
      %s87 = sphi 0, %s89
      %s90 = sphi 0, %s87
      %s91 = sphi 0, %s90
      %s107 = sphi 0, %s91
    $region4: #{tpu_custom_call.1} parent=1 // loop_header_branch
      %17 = sbr.rel (%p15) target = $region8
    $region5: #{tpu_custom_call.1} parent=1 // loop_body
      %s19 = ssub.s32 %s14, 1
      %s20 = ssub.s32 %s14, 2
      %s27 = sadd.s32 1, %s22
      %p28 = scmp.ge.s32.totalorder %s27, 1
      %s29 = scalar_select %p28, 0, %s27
      %s30 = sadd.s32 1, %s21
      %s31 = scalar_select %p28, %s30, %s21
      %p32 = scmp.ge.s32.totalorder %s31, 2
      %s33 = scalar_select %p32, 0, %s31
      %s34 = ssub.s32 %s21, %s33
      %s35 = ssub.s32 %s22, %s29
      %s36 = sor.u32 %s34, %s35
      %p37 = scmp.eq.s32.totalorder %s36, 0
      %s39 = sadd.s32 %s38, 1
      %s40 = scalar_select %p37, %s38, %s39
      %p43 = pneg %p37
      %p44 = scmp.eq.s32.totalorder %s14, 1
      %p45 = por %p43, %p44
      %p46 = scmp.ne.s32.totalorder %s38, %s41
      %p47 = scmp.eq.s32.totalorder %s14, 0
      %p48 = por %p46, %p47
      %p49 = scmp.ne.s32.totalorder %s38, %s41
      %p50 = scmp.eq.s32.totalorder %s19, 1
      %p51 = por %p49, %p50
      %p52 = scmp.ne.s32.totalorder %s41, %s42
      %p53 = scmp.eq.s32.totalorder %s19, 0
      %p54 = por %p52, %p53
      %p55 = scmp.ne.s32.totalorder %s41, %s42
      %p56 = scmp.eq.s32.totalorder %s20, 1
      %p57 = por %p55, %p56
      %p59 = scmp.ne.s32.totalorder %s42, %s58
      %p60 = scmp.eq.s32.totalorder %s20, 0
      %p61 = por %p59, %p60
      %s63 = sadd.s32 %s62, 1
      %p66 = scmp.eq.s32.totalorder %s14, 1
      %p67 = scmp.ne.s32.totalorder %s62, %s64
      %p68 = scmp.eq.s32.totalorder %s14, 0
      %p69 = por %p67, %p68
      %p70 = scmp.ne.s32.totalorder %s62, %s64
      %p71 = scmp.eq.s32.totalorder %s19, 1
      %p72 = por %p70, %p71
      %p73 = scmp.ne.s32.totalorder %s64, %s65
      %p74 = scmp.eq.s32.totalorder %s19, 0
      %p75 = por %p73, %p74
      %p76 = scmp.ne.s32.totalorder %s64, %s65
      %p77 = scmp.eq.s32.totalorder %s20, 1
      %p78 = por %p76, %p77
      %p80 = scmp.ne.s32.totalorder %s65, %s79
      %p81 = scmp.eq.s32.totalorder %s20, 0
      %p82 = por %p80, %p81
      %s83 = ssub.s32 %s21, %s33
      %s84 = ssub.s32 %s22, %s29
      %s85 = sor.u32 %s83, %s84
      %p86 = scmp.eq.s32.totalorder %s85, 0
      %s88 = sadd.s32 %s87, 1
      %s89 = scalar_select %p86, %s87, %s88
      %p92 = pneg %p86
      %p93 = scmp.eq.s32.totalorder %s14, 1
      %p94 = por %p92, %p93
      %p95 = scmp.ne.s32.totalorder %s87, %s90
      %p96 = scmp.eq.s32.totalorder %s14, 0
      %p97 = por %p95, %p96
      %p98 = scmp.ne.s32.totalorder %s87, %s90
      %p99 = scmp.eq.s32.totalorder %s19, 1
      %p100 = por %p98, %p99
      %p101 = scmp.ne.s32.totalorder %s90, %s91
      %p102 = scmp.eq.s32.totalorder %s19, 0
      %p103 = por %p101, %p102
      %p104 = scmp.ne.s32.totalorder %s90, %s91
      %p105 = scmp.eq.s32.totalorder %s20, 1
      %p106 = por %p104, %p105
      %p108 = scmp.ne.s32.totalorder %s91, %s107
      %p109 = scmp.eq.s32.totalorder %s20, 0
      %p110 = por %p108, %p109
      %p111 = scmp.le.s32.totalorder 1, %s14
      %p112 = scmp.lt.s32.totalorder %s14, 3
      %p113 = pnand %p111, %p112
      %p114 = pneg %p113
      // Predicated region
      $region9: #{tpu_custom_call.1} parent=5 // pred_check
        _
      $region10: #{tpu_custom_call.1} parent=5 // pred_check_branch
        %116 = sbr.rel (%p113) target = $region12
      $region11: #{tpu_custom_call.1} parent=5 // pred_region
        %s117 = ssub.s32 %s14, 1
        // Predicated region
        $region13: #{tpu_custom_call.1} parent=11 // pred_check
          %p118 = pneg %p75
        $region14: #{tpu_custom_call.1} parent=11 // pred_check_branch
          %120 = sbr.rel (%p118) target = $region16
        $region15: #{tpu_custom_call.1} parent=11 // pred_region
          _
        $region16: #{tpu_custom_call.1} parent=11 // pred_fallthru
          _
      $region12: #{tpu_custom_call.1} parent=5 // pred_fallthru
        _
      %p121 = scmp.lt.s32.totalorder %s14, 2
      // Predicated region
      $region17: #{tpu_custom_call.1} parent=5 // pred_check
        %p122 = pneg %p121
      $region18: #{tpu_custom_call.1} parent=5 // pred_check_branch
        %124 = sbr.rel (%p122) target = $region20
      $region19: #{tpu_custom_call.1} parent=5 // pred_region
        // Predicated region
        $region21: #{tpu_custom_call.1} parent=19 // pred_check
          %p125 = pneg %p48
        $region22: #{tpu_custom_call.1} parent=19 // pred_check_branch
          %127 = sbr.rel (%p125) target = $region24
        $region23: #{tpu_custom_call.1} parent=19 // pred_region
          %s128 = sand.u32 %s38, 1
          %s129 = scalar_lea.sflag [#allocation3], %s128
          %s130 = sand.u32 %s38, 1
          %s131 = smul.addr %s130, 64
          %s132 = scalar_lea.vmem [#allocation2], %s131
          %s133 = smul.u32 2, %s22
          %135 = vsyncadd %s129, 0
          %s136 = smul.addr %s21, 8
          %s137 = sadd.s32 %s133, %s136
          %s138 = smul.addr %s137, 8
          %s139 = scalar_lea.hbm %s0, %s138
          %s140 = sshll.u32 %s139, 4
          %s141 = int_to_ptr.hbm [resolvable:$true] %s140
          %s142 = sshll.u32 %s132, 4
          %s143 = int_to_ptr.vmem [resolvable:$true] %s142
          %148 = dma.hbm_to_vmem [thread:$0]  %s141, 1024, %s143, %s129, 256, 256, 16
        $region24: #{tpu_custom_call.1} parent=19 // pred_fallthru
          _
      $region20: #{tpu_custom_call.1} parent=5 // pred_fallthru
        _
      %p149 = scmp.le.s32.totalorder 1, %s14
      %p150 = scmp.lt.s32.totalorder %s14, 3
      %p151 = pnand %p149, %p150
      %p152 = pneg %p151
      // Predicated region
      $region25: #{tpu_custom_call.1} parent=5 // pred_check
        _
      $region26: #{tpu_custom_call.1} parent=5 // pred_check_branch
        %154 = sbr.rel (%p151) target = $region28
      $region27: #{tpu_custom_call.1} parent=5 // pred_region
        %s155 = ssub.s32 %s14, 1
        %s156 = sand.u32 %s41, 1
        %s157 = scalar_lea.sflag [#allocation3], %s156
        %s158 = sand.u32 %s41, 1
        %s159 = smul.addr %s158, 64
        %s160 = scalar_lea.vmem [#allocation2], %s159
        // Predicated region
        $region29: #{tpu_custom_call.1} parent=27 // pred_check
          %p161 = pneg %p54
        $region30: #{tpu_custom_call.1} parent=27 // pred_check_branch
          %163 = sbr.rel (%p161) target = $region32
        $region31: #{tpu_custom_call.1} parent=27 // pred_region
          %165 = dma.done %s157, 1024
        $region32: #{tpu_custom_call.1} parent=27 // pred_fallthru
          _
        %s166 = sand.u32 %s41, 1
        %s167 = scalar_lea.sflag [#allocation3], %s166
        %s168 = sand.u32 %s41, 1
        %s169 = smul.addr %s168, 64
        %s170 = scalar_lea.vmem [#allocation2], %s169
        %p171 = pneg %p54
        %p172 = pneg %p51
        %p173 = pneg %p75
        %p174 = pneg %p72
        %p175 = pneg %p103
        %p176 = pneg %p100
        %s177 = sand.u32 %s90, 1
        %s178 = scalar_lea.sflag [#allocation4], %s177
        %s179 = sand.u32 %s90, 1
        %s180 = smul.addr %s179, 32
        %s181 = scalar_lea.vmem [#allocation5], %s180
        %s182 = smul.u32 2, %s24
        %s183 = smul.u32 2, %s24
        %v184 = vld [vmem:[%s1] sm:$0xff]
        %v185 = vld [vmem:[%s1 + $0x8] sm:$0xff]
        %v186 = vld [vmem:[%s1 + $0x10] sm:$0xff]
        %v187 = vld [vmem:[%s1 + $0x18] sm:$0xff]
        %v188 = vld [vmem:[%s1 + $0x20] sm:$0xff]
        %v189 = vld [vmem:[%s1 + $0x28] sm:$0xff]
        %v190 = vld [vmem:[%s160] sm:$0xff]
        %v191 = vld [vmem:[%s160 + $0x8] sm:$0xff]
        %v192 = vld [vmem:[%s160 + $0x10] sm:$0xff]
        %v193 = vld [vmem:[%s160 + $0x18] sm:$0xff]
        %v194 = vld [vmem:[%s160 + $0x20] sm:$0xff]
        %v195 = vld [vmem:[%s160 + $0x28] sm:$0xff]
        %v196 = vld [vmem:[%s160 + $0x30] sm:$0xff]
        %v197 = vld [vmem:[%s160 + $0x38] sm:$0xff]
        %vm198 = vcmask 261120
        %v200 = vsel %vm198, %v184, 0
        %v203 = vsel %vm198, %v185, 0
        %v206 = vsel %vm198, %v186, 0
        %v209 = vsel %vm198, %v187, 0
        %v212 = vsel %vm198, %v188, 0
        %v215 = vsel %vm198, %v189, 0
        %217 = vmatpush.msra.mxu0 0.0
        %218 = vmatpush.msra.mxu0 0.0
        %219 = vmatpush.msra.mxu0 0.0
        %220 = vmatpush.msra.mxu0 0.0
        %221 = vmatpush.msra.mxu0 0.0
        %222 = vmatpush.msra.mxu0 0.0
        %223 = vmatpush.msra.mxu0 0.0
        %224 = vmatpush.msra.mxu0 0.0
        %225 = vmatpush.msra.mxu0 0.0
        %226 = vmatpush.msra.mxu0 0.0
        %227 = vmatpush.msra.mxu0 0.0
        %228 = vmatpush.msra.mxu0 0.0
        %229 = vmatpush.msra.mxu0 %v196
        %230 = vmatpush.msra.mxu0 %v194
        %231 = vmatpush.msra.mxu0 %v192
        %232 = vmatpush.msra.mxu0 %v190
        %233 = vmatmul.f32.gmra.mxu0 %v200
        %v234 = vpop.f32.mrf.mxu0
        %v235 = vadd.f32 0.0, %v234
        %236 = vmatmul.f32.gmra.mxu0 %v203
        %v237 = vpop.f32.mrf.mxu0
        %v238 = vadd.f32 0.0, %v237
        %239 = vmatmul.f32.gmra.mxu0 %v206
        %v240 = vpop.f32.mrf.mxu0
        %v241 = vadd.f32 0.0, %v240
        %242 = vmatmul.f32.gmra.mxu0 %v209
        %v243 = vpop.f32.mrf.mxu0
        %v244 = vadd.f32 0.0, %v243
        %245 = vmatmul.f32.gmra.mxu0 %v212
        %v246 = vpop.f32.mrf.mxu0
        %v247 = vadd.f32 0.0, %v246
        %248 = vmatmul.f32.gmra.mxu0 %v215
        %v249 = vpop.f32.mrf.mxu0
        %v250 = vadd.f32 0.0, %v249
        %251 = vdwg.mxu0
        %252 = vmatpush.msra.mxu0 0.0
        %253 = vmatpush.msra.mxu0 0.0
        %254 = vmatpush.msra.mxu0 0.0
        %255 = vmatpush.msra.mxu0 0.0
        %256 = vmatpush.msra.mxu0 0.0
        %257 = vmatpush.msra.mxu0 0.0
        %258 = vmatpush.msra.mxu0 0.0
        %259 = vmatpush.msra.mxu0 0.0
        %260 = vmatpush.msra.mxu0 0.0
        %261 = vmatpush.msra.mxu0 0.0
        %262 = vmatpush.msra.mxu0 0.0
        %263 = vmatpush.msra.mxu0 0.0
        %264 = vmatpush.msra.mxu0 %v197
        %265 = vmatpush.msra.mxu0 %v195
        %266 = vmatpush.msra.mxu0 %v193
        %267 = vmatpush.msra.mxu0 %v191
        %268 = vmatmul.f32.gmra.mxu0 %v200
        %v269 = vpop.f32.mrf.mxu0
        %v270 = vadd.f32 0.0, %v269
        %271 = vmatmul.f32.gmra.mxu0 %v203
        %v272 = vpop.f32.mrf.mxu0
        %v273 = vadd.f32 0.0, %v272
        %274 = vmatmul.f32.gmra.mxu0 %v206
        %v275 = vpop.f32.mrf.mxu0
        %v276 = vadd.f32 0.0, %v275
        %277 = vmatmul.f32.gmra.mxu0 %v209
        %v278 = vpop.f32.mrf.mxu0
        %v279 = vadd.f32 0.0, %v278
        %280 = vmatmul.f32.gmra.mxu0 %v212
        %v281 = vpop.f32.mrf.mxu0
        %v282 = vadd.f32 0.0, %v281
        %283 = vmatmul.f32.gmra.mxu0 %v215
        %v284 = vpop.f32.mrf.mxu0
        %v285 = vadd.f32 0.0, %v284
        %286 = vdwg.mxu0
        %v287 = vmul.f32 %v235, %v241
        %v288 = vmul.f32 %v270, %v276
        %v289 = vmul.f32 %v238, %v244
        %v290 = vmul.f32 %v273, %v279
        %v291 = vxor.u32 %v287, 2147483648
        %v292 = vxor.u32 %v288, 2147483648
        %v293 = vxor.u32 %v289, 2147483648
        %v294 = vxor.u32 %v290, 2147483648
        %v295 = vmul.f32 %v291, 1.442695
        %v296 = vpow.pop %v295
        %v297 = vmul.f32 %v292, 1.442695
        %v298 = vpow.pop %v297
        %v299 = vmul.f32 %v293, 1.442695
        %v300 = vpow.pop %v299
        %v301 = vmul.f32 %v294, 1.442695
        %v302 = vpow.pop %v301
        %v303 = vadd.f32 %v296, 1.0
        %v304 = vadd.f32 %v298, 1.0
        %v305 = vadd.f32 %v300, 1.0
        %v306 = vadd.f32 %v302, 1.0
        %v307 = vrcp.pop %v303
        %v308 = vmul.f32 %v303, %v307
        %v309 = vsub.f32 1.0, %v308
        %v310 = vmul.f32 %v307, %v309
        %v311 = vadd.f32 %v307, %v310
        %vm312 = vweird.f32 %v303
        %vm313 = vweird.f32 %v307
        %vm314 = vmor %vm312, %vm313
        %v315 = vsel %vm314, %v307, %v311
        %v316 = vand.u32 2147483647, %v303
        %vm317 = vcmp.eq.f32.partialorder %v316, 8.507059e+37
        %v318 = vand.u32 %v303, 2147483648
        %v319 = vor.u32 1.1754944e-38, %v318
        %v320 = vsel %vm317, %v319, %v315
        %v321 = vmul.f32 1.0, %v320
        %v322 = vrcp.pop %v304
        %v323 = vmul.f32 %v304, %v322
        %v324 = vsub.f32 1.0, %v323
        %v325 = vmul.f32 %v322, %v324
        %v326 = vadd.f32 %v322, %v325
        %vm327 = vweird.f32 %v304
        %vm328 = vweird.f32 %v322
        %vm329 = vmor %vm327, %vm328
        %v330 = vsel %vm329, %v322, %v326
        %v331 = vand.u32 2147483647, %v304
        %vm332 = vcmp.eq.f32.partialorder %v331, 8.507059e+37
        %v333 = vand.u32 %v304, 2147483648
        %v334 = vor.u32 1.1754944e-38, %v333
        %v335 = vsel %vm332, %v334, %v330
        %v336 = vmul.f32 1.0, %v335
        %v337 = vrcp.pop %v305
        %v338 = vmul.f32 %v305, %v337
        %v339 = vsub.f32 1.0, %v338
        %v340 = vmul.f32 %v337, %v339
        %v341 = vadd.f32 %v337, %v340
        %vm342 = vweird.f32 %v305
        %vm343 = vweird.f32 %v337
        %vm344 = vmor %vm342, %vm343
        %v345 = vsel %vm344, %v337, %v341
        %v346 = vand.u32 2147483647, %v305
        %vm347 = vcmp.eq.f32.partialorder %v346, 8.507059e+37
        %v348 = vand.u32 %v305, 2147483648
        %v349 = vor.u32 1.1754944e-38, %v348
        %v350 = vsel %vm347, %v349, %v345
        %v351 = vmul.f32 1.0, %v350
        %v352 = vrcp.pop %v306
        %v353 = vmul.f32 %v306, %v352
        %v354 = vsub.f32 1.0, %v353
        %v355 = vmul.f32 %v352, %v354
        %v356 = vadd.f32 %v352, %v355
        %vm357 = vweird.f32 %v306
        %vm358 = vweird.f32 %v352
        %vm359 = vmor %vm357, %vm358
        %v360 = vsel %vm359, %v352, %v356
        %v361 = vand.u32 2147483647, %v306
        %vm362 = vcmp.eq.f32.partialorder %v361, 8.507059e+37
        %v363 = vand.u32 %v306, 2147483648
        %v364 = vor.u32 1.1754944e-38, %v363
        %v365 = vsel %vm362, %v364, %v360
        %v366 = vmul.f32 1.0, %v365
        %v367 = vmul.f32 %v247, %v321
        %v368 = vmul.f32 %v282, %v336
        %v369 = vmul.f32 %v250, %v351
        %v370 = vmul.f32 %v285, %v366
        %371 = vst [vmem:[%s181] sm:$0xff] %v367
        %372 = vst [vmem:[%s181 + $0x8] sm:$0xff] %v368
        %373 = vst [vmem:[%s181 + $0x10] sm:$0xff] %v369
        %374 = vst [vmem:[%s181 + $0x18] sm:$0xff] %v370
        %s375 = sand.u32 %s90, 1
        %s376 = scalar_lea.sflag [#allocation4], %s375
        %s377 = sand.u32 %s90, 1
        %s378 = smul.addr %s377, 32
        %s379 = scalar_lea.vmem [#allocation5], %s378
        // Predicated region
        $region33: #{tpu_custom_call.1} parent=27 // pred_check
          %p380 = pneg %p100
        $region34: #{tpu_custom_call.1} parent=27 // pred_check_branch
          %382 = sbr.rel (%p380) target = $region36
        $region35: #{tpu_custom_call.1} parent=27 // pred_region
          %s383 = smul.u32 2, %s24
          %385 = vsyncadd %s376, 0
          %s386 = smul.addr %s23, 4
          %s387 = sadd.s32 %s383, %s386
          %s388 = smul.addr %s387, 8
          %s389 = scalar_lea.hbm %s2, %s388
          %s390 = sshll.u32 %s379, 4
          %s391 = int_to_ptr.vmem [resolvable:$true] %s390
          %s392 = sshll.u32 %s389, 4
          %s393 = int_to_ptr.hbm [resolvable:$true] %s392
          %398 = dma.vmem_to_hbm [thread:$0]  %s391, 512, %s393, %s376, 256, 256, 16
        $region36: #{tpu_custom_call.1} parent=27 // pred_fallthru
          _
      $region28: #{tpu_custom_call.1} parent=5 // pred_fallthru
        _
      %p399 = scmp.le.s32.totalorder 2, %s14
      // Predicated region
      $region37: #{tpu_custom_call.1} parent=5 // pred_check
        %p400 = pneg %p399
      $region38: #{tpu_custom_call.1} parent=5 // pred_check_branch
        %402 = sbr.rel (%p400) target = $region40
      $region39: #{tpu_custom_call.1} parent=5 // pred_region
        %s403 = ssub.s32 %s14, 2
        // Predicated region
        $region41: #{tpu_custom_call.1} parent=39 // pred_check
          %p404 = pneg %p106
        $region42: #{tpu_custom_call.1} parent=39 // pred_check_branch
          %406 = sbr.rel (%p404) target = $region44
        $region43: #{tpu_custom_call.1} parent=39 // pred_region
          %s407 = sand.u32 %s91, 1
          %s408 = scalar_lea.sflag [#allocation4], %s407
          %s409 = sand.u32 %s91, 1
          %s410 = smul.addr %s409, 32
          %s411 = scalar_lea.vmem [#allocation5], %s410
          %413 = dma.done %s408, 512
        $region44: #{tpu_custom_call.1} parent=39 // pred_fallthru
          _
      $region40: #{tpu_custom_call.1} parent=5 // pred_fallthru
        _
    $region6: #{tpu_custom_call.1} parent=1 // loop_footer
      %s18 = sadd.s32 1, %s14
    $region7: #{tpu_custom_call.1} parent=1 // loop_footer_branch
      %13 = sbr.rel target = $region3
    $region8: #{tpu_custom_call.1} parent=1 // loop_exit
      _
    %414 = vsyncpa [#allocation3], 1
    %s415 = scalar_lea.sflag [#allocation3], 1
    %416 = vsyncpa %s415, 1
    %417 = vsyncpa [#allocation4], 1
    %s418 = scalar_lea.sflag [#allocation4], 1
    %419 = vsyncpa %s418, 1

</llo_original>
